<compile_context>
chip_gen: v7x
topology: tpu7x:2x2x1
jax: 0.10.0
libtpu: 0.0.40
codegen_flags: <defaults>
</compile_context>

<pallas_src>
import jax
import jax.numpy as jnp
from jax.experimental import pallas as pl
from jax.experimental.pallas import tpu as pltpu

HIDDEN = 256


def _mlp_kernel(x_ref,
                w1_ref, b1_ref,
                w2_ref, b2_ref,
                w3_ref, b3_ref,
                w4_ref, b4_ref,
                o_ref):
    """Fused 4-layer MLP on one [tm, D] batch tile.

    Matmuls hit the MXU with bf16 operands / f32 accumulation; bias add + ReLU stay in
    f32 on the VPU.
    """
    def layer(h_bf16, w_ref, b_ref, relu):
        h = jnp.dot(h_bf16, w_ref[...],
                    preferred_element_type=jnp.float32) + b_ref[...]
        return jnp.maximum(h, 0.0) if relu else h

    h = layer(x_ref[...].astype(jnp.bfloat16), w1_ref, b1_ref, relu=True)
    h = layer(h.astype(jnp.bfloat16),          w2_ref, b2_ref, relu=True)
    h = layer(h.astype(jnp.bfloat16),          w3_ref, b3_ref, relu=True)
    h = layer(h.astype(jnp.bfloat16),          w4_ref, b4_ref, relu=False)
    o_ref[...] = h.astype(o_ref.dtype)


def _ceil_div(a, b):
    return -(-a // b)


def _num_tensorcores():
    """v5e/v6e: 1 TensorCore per chip; v7x: 2. Only affects tiling, never correctness."""
    kind = jax.devices()[0].device_kind.lower()
    return 2 if "v7" in kind else 1


def _pick_batch_tiling(batch, *, max_tile=1024, num_cores=1):
    """Fewest tiles, minimal padding; tile count balanced across TensorCores."""
    n_tiles = max(_ceil_div(batch, max_tile), 1)
    if num_cores > 1 and batch >= num_cores * 8:
        n_tiles = max(n_tiles, num_cores)
    if num_cores > 1 and n_tiles > 1 and n_tiles % num_cores:
        n_tiles += num_cores - (n_tiles % num_cores)
    tm = _ceil_div(_ceil_div(batch, n_tiles), 8) * 8     # sublane multiple of 8
    return tm, _ceil_div(batch, tm)


def init_params(key, input_size, hidden_size=HIDDEN):
    """PyTorch-layout params mimicking nn.Linear default init: W [out,in], b [out]."""
    sizes = [(hidden_size, input_size),
             (hidden_size, hidden_size),
             (hidden_size, hidden_size),
             (hidden_size, hidden_size)]
    params = []
    for (fan_out, fan_in) in sizes:
        key, kw, kb = jax.random.split(key, 3)
        bound = 1.0 / (fan_in ** 0.5)
        w = jax.random.uniform(kw, (fan_out, fan_in), jnp.float32, -bound, bound)
        b = jax.random.uniform(kb, (fan_out,), jnp.float32, -bound, bound)
        params.append((w, b))
    return params


def prepare_params(params):
    """ONE-TIME conversion for the kernel: W -> bf16 [in, out], b -> f32 [1, out].

    Do this once at init, not per forward call — per-call casts are an extra HBM pass
    over ~800 KiB of weights every step.
    """
    return [(jnp.asarray(w.T, jnp.bfloat16),
             jnp.asarray(b, jnp.float32).reshape(1, -1))
            for (w, b) in params]


def random_net_dist_forward(x, params, *, max_tile=1024, out_dtype=None):
    """x: [B, input_size]. params: 4 prepared (W_bf16 [in,out], b_f32 [1,out]) pairs.

    Batch axis is tiled with the fewest, minimally padded tiles ("parallel" -> megacore
    sharding on v7x). The final partial tile runs out-of-bounds: OOB loads are
    don't-care rows (rows are independent), OOB stores are masked by Pallas, so there is
    no wrapper-side pad/slice HBM pass.
    """
    B, D = x.shape
    H = params[-1][0].shape[1]
    out_dtype = x.dtype if out_dtype is None else out_dtype

    tm, n_tiles = _pick_batch_tiling(B, max_tile=max_tile,
                                     num_cores=_num_tensorcores())

    in_specs = [pl.BlockSpec((tm, D), lambda i: (i, 0))]
    flat_args = []
    for w, b in params:
        # Static dtype check only: no cast op is emitted when params were prepared once.
        flat_args.append(w if w.dtype == jnp.bfloat16 else w.astype(jnp.bfloat16))
        flat_args.append(b if b.dtype == jnp.float32 else b.astype(jnp.float32))
        # Grid-invariant blocks (constant index_map): DMA'd once, reused every grid step.
        in_specs.append(pl.BlockSpec(w.shape, lambda i: (0, 0)))
        in_specs.append(pl.BlockSpec(b.shape, lambda i: (0, 0)))

    return pl.pallas_call(
        _mlp_kernel,
        out_shape=jax.ShapeDtypeStruct((B, H), out_dtype),
        grid_spec=pl.GridSpec(
            grid=(n_tiles,),
            in_specs=in_specs,
            out_specs=pl.BlockSpec((tm, H), lambda i: (i, 0)),
        ),
        compiler_params=pltpu.CompilerParams(
            dimension_semantics=("parallel",),   # batch axis: shard across TCs (v7x)
        ),
    )(x, *flat_args)


def _reference(x, params):
    """Same math as the kernel: bf16 matmul operands, f32 accumulation / bias / ReLU."""
    h = x
    for idx, (w, b) in enumerate(params):
        h = jnp.dot(h.astype(jnp.bfloat16), w,
                    preferred_element_type=jnp.float32) + b
        if idx < len(params) - 1:
            h = jnp.maximum(h, 0.0)
    return h


if __name__ == "__main__":
    key = jax.random.PRNGKey(0)
    k_p, k_x1, k_x2 = jax.random.split(key, 3)

    observation_space = 32                       # input_size
    raw_params = init_params(k_p, observation_space, HIDDEN)
    params = prepare_params(raw_params)          # one-time bf16/f32 conversion

    # Small batch: single full tile, no padding, no partial block.
    x1 = jax.random.normal(k_x1, (8, observation_space), jnp.float32)
    out1 = jax.block_until_ready(random_net_dist_forward(x1, params))
    ref1 = _reference(x1, params)
    assert out1.shape == (8, HIDDEN)
    assert jnp.allclose(out1, ref1, atol=5e-3, rtol=5e-3), \
        float(jnp.max(jnp.abs(out1 - ref1)))

    # Non-multiple batch: exercises the masked, partially out-of-bounds final tile
    # (and 2 balanced "parallel" tiles on v7x).
    x2 = jax.random.normal(k_x2, (300, observation_space), jnp.float32)
    out2 = jax.block_until_ready(random_net_dist_forward(x2, params))
    ref2 = _reference(x2, params)
    assert out2.shape == (300, HIDDEN)
    assert jnp.allclose(out2, ref2, atol=5e-3, rtol=5e-3), \
        float(jnp.max(jnp.abs(out2 - ref2)))

    print("KERNEL_OK")
</pallas_src>

<mosaic_0001>
module attributes {stable_mosaic.version = 11 : i64} {
  func.func @_mlp_kernel(%arg0: i32, %arg1: memref<8x32xf32, #tpu.memory_space<vmem>>, %arg2: memref<32x256xbf16, #tpu.memory_space<vmem>>, %arg3: memref<1x256xf32, #tpu.memory_space<vmem>>, %arg4: memref<256x256xbf16, #tpu.memory_space<vmem>>, %arg5: memref<1x256xf32, #tpu.memory_space<vmem>>, %arg6: memref<256x256xbf16, #tpu.memory_space<vmem>>, %arg7: memref<1x256xf32, #tpu.memory_space<vmem>>, %arg8: memref<256x256xbf16, #tpu.memory_space<vmem>>, %arg9: memref<1x256xf32, #tpu.memory_space<vmem>>, %arg10: memref<8x256xf32, #tpu.memory_space<vmem>>) attributes {dimension_semantics = [#tpu.dimension_semantics<parallel>], iteration_bounds = array<i64: 1>, scalar_prefetch = 0 : i64, scratch_operands = 0 : i64, tpu.core_type = #tpu.core_type<tc>, window_params = [{transform_indices = @transform_0, window_bounds = array<i64: 8, 32>}, {pipeline_mode = #tpu.pipeline_mode<synchronous>, transform_indices = @transform_1, window_bounds = array<i64: 32, 256>}, {pipeline_mode = #tpu.pipeline_mode<synchronous>, transform_indices = @transform_2, window_bounds = array<i64: 1, 256>}, {pipeline_mode = #tpu.pipeline_mode<synchronous>, transform_indices = @transform_3, window_bounds = array<i64: 256, 256>}, {pipeline_mode = #tpu.pipeline_mode<synchronous>, transform_indices = @transform_4, window_bounds = array<i64: 1, 256>}, {pipeline_mode = #tpu.pipeline_mode<synchronous>, transform_indices = @transform_5, window_bounds = array<i64: 256, 256>}, {pipeline_mode = #tpu.pipeline_mode<synchronous>, transform_indices = @transform_6, window_bounds = array<i64: 1, 256>}, {pipeline_mode = #tpu.pipeline_mode<synchronous>, transform_indices = @transform_7, window_bounds = array<i64: 256, 256>}, {pipeline_mode = #tpu.pipeline_mode<synchronous>, transform_indices = @transform_8, window_bounds = array<i64: 1, 256>}, {transform_indices = @transform_9, window_bounds = array<i64: 8, 256>}]} {
    %c0 = arith.constant 0 : index
    %c0_0 = arith.constant 0 : index
    %0 = vector.load %arg1[%c0, %c0_0] : memref<8x32xf32, #tpu.memory_space<vmem>>, vector<8x32xf32>
    %1 = arith.truncf %0 : vector<8x32xf32> to vector<8x32xbf16>
    %c0_1 = arith.constant 0 : index
    %c0_2 = arith.constant 0 : index
    %2 = vector.load %arg2[%c0_1, %c0_2] : memref<32x256xbf16, #tpu.memory_space<vmem>>, vector<32x256xbf16>
    %cst = arith.constant dense<0.000000e+00> : vector<8x256xf32>
    %3 = tpu.matmul %1, %2, %cst {dimension_numbers = #tpu.dot_dimension_numbers<[1], [0], [0], [1], [0, 0, 1, 1], [], []>} : vector<8x32xbf16>, vector<32x256xbf16>, vector<8x256xf32> -> vector<8x256xf32>
    %c0_3 = arith.constant 0 : index
    %c0_4 = arith.constant 0 : index
    %4 = vector.load %arg3[%c0_3, %c0_4] : memref<1x256xf32, #tpu.memory_space<vmem>>, vector<1x256xf32>
    %5 = vector.broadcast %4 : vector<1x256xf32> to vector<8x256xf32>
    %6 = arith.addf %3, %5 : vector<8x256xf32>
    %cst_5 = arith.constant 0.000000e+00 : f32
    %7 = vector.broadcast %cst_5 : f32 to vector<8x256xf32>
    %8 = arith.maximumf %6, %7 : vector<8x256xf32>
    %9 = arith.truncf %8 : vector<8x256xf32> to vector<8x256xbf16>
    %c0_6 = arith.constant 0 : index
    %c0_7 = arith.constant 0 : index
    %10 = vector.load %arg4[%c0_6, %c0_7] : memref<256x256xbf16, #tpu.memory_space<vmem>>, vector<256x256xbf16>
    %cst_8 = arith.constant dense<0.000000e+00> : vector<8x256xf32>
    %11 = tpu.matmul %9, %10, %cst_8 {dimension_numbers = #tpu.dot_dimension_numbers<[1], [0], [0], [1], [0, 0, 1, 1], [], []>} : vector<8x256xbf16>, vector<256x256xbf16>, vector<8x256xf32> -> vector<8x256xf32>
    %c0_9 = arith.constant 0 : index
    %c0_10 = arith.constant 0 : index
    %12 = vector.load %arg5[%c0_9, %c0_10] : memref<1x256xf32, #tpu.memory_space<vmem>>, vector<1x256xf32>
    %13 = vector.broadcast %12 : vector<1x256xf32> to vector<8x256xf32>
    %14 = arith.addf %11, %13 : vector<8x256xf32>
    %cst_11 = arith.constant 0.000000e+00 : f32
    %15 = vector.broadcast %cst_11 : f32 to vector<8x256xf32>
    %16 = arith.maximumf %14, %15 : vector<8x256xf32>
    %17 = arith.truncf %16 : vector<8x256xf32> to vector<8x256xbf16>
    %c0_12 = arith.constant 0 : index
    %c0_13 = arith.constant 0 : index
    %18 = vector.load %arg6[%c0_12, %c0_13] : memref<256x256xbf16, #tpu.memory_space<vmem>>, vector<256x256xbf16>
    %cst_14 = arith.constant dense<0.000000e+00> : vector<8x256xf32>
    %19 = tpu.matmul %17, %18, %cst_14 {dimension_numbers = #tpu.dot_dimension_numbers<[1], [0], [0], [1], [0, 0, 1, 1], [], []>} : vector<8x256xbf16>, vector<256x256xbf16>, vector<8x256xf32> -> vector<8x256xf32>
    %c0_15 = arith.constant 0 : index
    %c0_16 = arith.constant 0 : index
    %20 = vector.load %arg7[%c0_15, %c0_16] : memref<1x256xf32, #tpu.memory_space<vmem>>, vector<1x256xf32>
    %21 = vector.broadcast %20 : vector<1x256xf32> to vector<8x256xf32>
    %22 = arith.addf %19, %21 : vector<8x256xf32>
    %cst_17 = arith.constant 0.000000e+00 : f32
    %23 = vector.broadcast %cst_17 : f32 to vector<8x256xf32>
    %24 = arith.maximumf %22, %23 : vector<8x256xf32>
    %25 = arith.truncf %24 : vector<8x256xf32> to vector<8x256xbf16>
    %c0_18 = arith.constant 0 : index
    %c0_19 = arith.constant 0 : index
    %26 = vector.load %arg8[%c0_18, %c0_19] : memref<256x256xbf16, #tpu.memory_space<vmem>>, vector<256x256xbf16>
    %cst_20 = arith.constant dense<0.000000e+00> : vector<8x256xf32>
    %27 = tpu.matmul %25, %26, %cst_20 {dimension_numbers = #tpu.dot_dimension_numbers<[1], [0], [0], [1], [0, 0, 1, 1], [], []>} : vector<8x256xbf16>, vector<256x256xbf16>, vector<8x256xf32> -> vector<8x256xf32>
    %c0_21 = arith.constant 0 : index
    %c0_22 = arith.constant 0 : index
    %28 = vector.load %arg9[%c0_21, %c0_22] : memref<1x256xf32, #tpu.memory_space<vmem>>, vector<1x256xf32>
    %29 = vector.broadcast %28 : vector<1x256xf32> to vector<8x256xf32>
    %30 = arith.addf %27, %29 : vector<8x256xf32>
    %c0_23 = arith.constant 0 : index
    %c0_24 = arith.constant 0 : index
    %31 = vector.load %arg10[%c0_23, %c0_24] : memref<8x256xf32, #tpu.memory_space<vmem>>, vector<8x256xf32>
    tpu.vector_store %arg10[%c0_23, %c0_24], %30 {strides = array<i32>} : memref<8x256xf32, #tpu.memory_space<vmem>>, vector<8x256xf32>,
    return
  }
  func.func @transform_0(%arg0: i32) -> (i32, i32) {
    %c0_i32 = arith.constant 0 : i32
    %c0_i32_0 = arith.constant 0 : i32
    return %arg0, %c0_i32 : i32, i32
  }
  func.func @transform_1(%arg0: i32) -> (i32, i32) {
    %c0_i32 = arith.constant 0 : i32
    %c0_i32_0 = arith.constant 0 : i32
    %c0_i32_1 = arith.constant 0 : i32
    return %c0_i32, %c0_i32_0 : i32, i32
  }
  func.func @transform_2(%arg0: i32) -> (i32, i32) {
    %c0_i32 = arith.constant 0 : i32
    %c0_i32_0 = arith.constant 0 : i32
    %c0_i32_1 = arith.constant 0 : i32
    return %c0_i32, %c0_i32_0 : i32, i32
  }
  func.func @transform_3(%arg0: i32) -> (i32, i32) {
    %c0_i32 = arith.constant 0 : i32
    %c0_i32_0 = arith.constant 0 : i32
    %c0_i32_1 = arith.constant 0 : i32
    return %c0_i32, %c0_i32_0 : i32, i32
  }
  func.func @transform_4(%arg0: i32) -> (i32, i32) {
    %c0_i32 = arith.constant 0 : i32
    %c0_i32_0 = arith.constant 0 : i32
    %c0_i32_1 = arith.constant 0 : i32
    return %c0_i32, %c0_i32_0 : i32, i32
  }
  func.func @transform_5(%arg0: i32) -> (i32, i32) {
    %c0_i32 = arith.constant 0 : i32
    %c0_i32_0 = arith.constant 0 : i32
    %c0_i32_1 = arith.constant 0 : i32
    return %c0_i32, %c0_i32_0 : i32, i32
  }
  func.func @transform_6(%arg0: i32) -> (i32, i32) {
    %c0_i32 = arith.constant 0 : i32
    %c0_i32_0 = arith.constant 0 : i32
    %c0_i32_1 = arith.constant 0 : i32
    return %c0_i32, %c0_i32_0 : i32, i32
  }
  func.func @transform_7(%arg0: i32) -> (i32, i32) {
    %c0_i32 = arith.constant 0 : i32
    %c0_i32_0 = arith.constant 0 : i32
    %c0_i32_1 = arith.constant 0 : i32
    return %c0_i32, %c0_i32_0 : i32, i32
  }
  func.func @transform_8(%arg0: i32) -> (i32, i32) {
    %c0_i32 = arith.constant 0 : i32
    %c0_i32_0 = arith.constant 0 : i32
    %c0_i32_1 = arith.constant 0 : i32
    return %c0_i32, %c0_i32_0 : i32, i32
  }
  func.func @transform_9(%arg0: i32) -> (i32, i32) {
    %c0_i32 = arith.constant 0 : i32
    %c0_i32_0 = arith.constant 0 : i32
    return %arg0, %c0_i32 : i32, i32
  }
}

</mosaic_0001>

<llo_original>
// kernel: tpu_custom_call.1
$region0: #{tpu_custom_call.1}
  #allocation0 [shape = 'u32[]', space=smem, size = 0x4, offset = 0x4, fixed_abs, tag = 'smem constant byte address 0x4 - core index']
  #allocation1 [shape = 'u32[144,128]{1,0:T(1,128)}', space=vmem, size = 0x12000, scoped, tag = 'internal scratch']
  %s0 = inlined_call_operand.hbm [shape: f32[8,32], index: 0, kind: input, shape index: {}]
  %s1 = inlined_call_operand.hbm [shape: bf16[32,256], index: 1, kind: input, shape index: {}]
  %s2 = inlined_call_operand.vmem [shape: f32[1,256], index: 2, kind: input, shape index: {}]
  %s3 = inlined_call_operand.hbm [shape: bf16[256,256], index: 3, kind: input, shape index: {}]
  %s4 = inlined_call_operand.vmem [shape: f32[1,256], index: 4, kind: input, shape index: {}]
  %s5 = inlined_call_operand.hbm [shape: bf16[256,256], index: 5, kind: input, shape index: {}]
  %s6 = inlined_call_operand.vmem [shape: f32[1,256], index: 6, kind: input, shape index: {}]
  %s7 = inlined_call_operand.hbm [shape: bf16[256,256], index: 7, kind: input, shape index: {}]
  %s8 = inlined_call_operand.vmem [shape: f32[1,256], index: 8, kind: input, shape index: {}]
  %s9 = inlined_call_operand.hbm [shape: f32[8,256], index: 9, kind: output, shape index: {}]
  %s10 = sld [smem:[#allocation0]]
  $region66: #{tpu_custom_call.1} parent=0
    _
  %s12 = ssub.s32 1, %s10
  %s13 = scalar_select 0, %s12, %s10
  $region1: #{tpu_custom_call.1} parent=0
    #allocation2 [shape = 'u8[4096]{0}', space=vmem, size = 0x1000, scoped, tag = 'input window, operand 0, single buffered']
    #allocation3 [shape = 's32[1]{0}', space=sflag, size = 0x4, scoped, tag = 'scoped memory for tpu_custom_call.1']
    #allocation4 [shape = 's32[1]{0}', space=sflag, size = 0x4, scoped, tag = 'scoped memory for tpu_custom_call.1']
    #allocation5 [shape = 'u8[16384]{0}', space=vmem, size = 0x4000, scoped, tag = 'input window, operand 1, single buffered']
    #allocation6 [shape = 's32[1]{0}', space=sflag, size = 0x4, scoped, tag = 'scoped memory for tpu_custom_call.1']
    #allocation7 [shape = 'u8[131072]{0}', space=vmem, size = 0x20000, scoped, tag = 'input window, operand 3, single buffered']
    #allocation8 [shape = 'u8[131072]{0}', space=vmem, size = 0x20000, scoped, tag = 'input window, operand 5, single buffered']
    #allocation9 [shape = 's32[1]{0}', space=sflag, size = 0x4, scoped, tag = 'scoped memory for tpu_custom_call.1']
    #allocation10 [shape = 'u8[131072]{0}', space=vmem, size = 0x20000, scoped, tag = 'input window, operand 7, single buffered']
    #allocation11 [shape = 'u8[8192]{0}', space=vmem, size = 0x2000, scoped, tag = 'output window, operand 0, single buffered']
    %14 = vsyncpa [#allocation3], 0
    %15 = vsyncpa [#allocation6], 0
    %16 = vsyncpa [#allocation9], 0
    %17 = vsyncpa [#allocation4], 0
    // Predicated region
    $region2: #{tpu_custom_call.1} parent=1 // pred_check
      _
    $region3: #{tpu_custom_call.1} parent=1 // pred_check_branch
      %19 = sbr.rel (0) target = $region5
    $region4: #{tpu_custom_call.1} parent=1 // pred_region
      %s21 = ssub.s32 128, 128
      %22 = vsyncadd [#allocation3], %s21
      %s24 = sshll.u32 [#allocation2], 4
      %s25 = int_to_ptr.vmem [resolvable:$true] %s24
      %27 = dma.hbm_to_vmem [thread:$0]  %s0, 128, %s25, [#allocation3]
    $region5: #{tpu_custom_call.1} parent=1 // pred_fallthru
      _
    // Predicated region
    $region6: #{tpu_custom_call.1} parent=1 // pred_check
      _
    $region7: #{tpu_custom_call.1} parent=1 // pred_check_branch
      %29 = sbr.rel (0) target = $region9
    $region8: #{tpu_custom_call.1} parent=1 // pred_region
      %s31 = ssub.s32 512, 512
      %32 = vsyncadd [#allocation6], %s31
      %s33 = sshll.u32 [#allocation5], 4
      %s34 = int_to_ptr.vmem [resolvable:$true] %s33
      %39 = dma.hbm_to_vmem [thread:$0]  %s1, 512, %s34, [#allocation6], 128, 128, 8
    $region9: #{tpu_custom_call.1} parent=1 // pred_fallthru
      _
    // Predicated region
    $region10: #{tpu_custom_call.1} parent=1 // pred_check
      _
    $region11: #{tpu_custom_call.1} parent=1 // pred_check_branch
      %41 = sbr.rel (0) target = $region13
    $region12: #{tpu_custom_call.1} parent=1 // pred_region
      _
    $region13: #{tpu_custom_call.1} parent=1 // pred_fallthru
      _
    // Predicated region
    $region14: #{tpu_custom_call.1} parent=1 // pred_check
      _
    $region15: #{tpu_custom_call.1} parent=1 // pred_check_branch
      %43 = sbr.rel (0) target = $region17
    $region16: #{tpu_custom_call.1} parent=1 // pred_region
      %s45 = ssub.s32 4096, 4096
      %46 = vsyncadd [#allocation6], %s45
      %s47 = sshll.u32 [#allocation7], 4
      %s48 = int_to_ptr.vmem [resolvable:$true] %s47
      %53 = dma.hbm_to_vmem [thread:$0]  %s3, 4096, %s48, [#allocation6], 128, 128, 8
    $region17: #{tpu_custom_call.1} parent=1 // pred_fallthru
      _
    // Predicated region
    $region18: #{tpu_custom_call.1} parent=1 // pred_check
      _
    $region19: #{tpu_custom_call.1} parent=1 // pred_check_branch
      %55 = sbr.rel (0) target = $region21
    $region20: #{tpu_custom_call.1} parent=1 // pred_region
      _
    $region21: #{tpu_custom_call.1} parent=1 // pred_fallthru
      _
    // Predicated region
    $region22: #{tpu_custom_call.1} parent=1 // pred_check
      _
    $region23: #{tpu_custom_call.1} parent=1 // pred_check_branch
      %57 = sbr.rel (0) target = $region25
    $region24: #{tpu_custom_call.1} parent=1 // pred_region
      %s59 = ssub.s32 4096, 4096
      %60 = vsyncadd [#allocation9], %s59
      %s61 = sshll.u32 [#allocation8], 4
      %s62 = int_to_ptr.vmem [resolvable:$true] %s61
      %67 = dma.hbm_to_vmem [thread:$0]  %s5, 4096, %s62, [#allocation9], 128, 128, 8
    $region25: #{tpu_custom_call.1} parent=1 // pred_fallthru
      _
    // Predicated region
    $region26: #{tpu_custom_call.1} parent=1 // pred_check
      _
    $region27: #{tpu_custom_call.1} parent=1 // pred_check_branch
      %69 = sbr.rel (0) target = $region29
    $region28: #{tpu_custom_call.1} parent=1 // pred_region
      _
    $region29: #{tpu_custom_call.1} parent=1 // pred_fallthru
      _
    // Predicated region
    $region30: #{tpu_custom_call.1} parent=1 // pred_check
      _
    $region31: #{tpu_custom_call.1} parent=1 // pred_check_branch
      %71 = sbr.rel (0) target = $region33
    $region32: #{tpu_custom_call.1} parent=1 // pred_region
      %s73 = ssub.s32 4096, 4096
      %74 = vsyncadd [#allocation9], %s73
      %s75 = sshll.u32 [#allocation10], 4
      %s76 = int_to_ptr.vmem [resolvable:$true] %s75
      %81 = dma.hbm_to_vmem [thread:$0]  %s7, 4096, %s76, [#allocation9], 128, 128, 8
    $region33: #{tpu_custom_call.1} parent=1 // pred_fallthru
      _
    // Predicated region
    $region34: #{tpu_custom_call.1} parent=1 // pred_check
      _
    $region35: #{tpu_custom_call.1} parent=1 // pred_check_branch
      %83 = sbr.rel (0) target = $region37
    $region36: #{tpu_custom_call.1} parent=1 // pred_region
      _
    $region37: #{tpu_custom_call.1} parent=1 // pred_fallthru
      _
    // Predicated region
    $region38: #{tpu_custom_call.1} parent=1 // pred_check
      _
    $region39: #{tpu_custom_call.1} parent=1 // pred_check_branch
      %85 = sbr.rel (0) target = $region41
    $region40: #{tpu_custom_call.1} parent=1 // pred_region
      %86 = dma.done [#allocation3], 128
    $region41: #{tpu_custom_call.1} parent=1 // pred_fallthru
      _
    // Predicated region
    $region42: #{tpu_custom_call.1} parent=1 // pred_check
      _
    $region43: #{tpu_custom_call.1} parent=1 // pred_check_branch
      %88 = sbr.rel (0) target = $region45
    $region44: #{tpu_custom_call.1} parent=1 // pred_region
      %89 = dma.done [#allocation6], 512
    $region45: #{tpu_custom_call.1} parent=1 // pred_fallthru
      _
    // Predicated region
    $region46: #{tpu_custom_call.1} parent=1 // pred_check
      _
    $region47: #{tpu_custom_call.1} parent=1 // pred_check_branch
      %91 = sbr.rel (0) target = $region49
    $region48: #{tpu_custom_call.1} parent=1 // pred_region
      %92 = dma.done [#allocation6], 4096
    $region49: #{tpu_custom_call.1} parent=1 // pred_fallthru
      _
    // Predicated region
    $region50: #{tpu_custom_call.1} parent=1 // pred_check
      _
    $region51: #{tpu_custom_call.1} parent=1 // pred_check_branch
      %94 = sbr.rel (0) target = $region53
    $region52: #{tpu_custom_call.1} parent=1 // pred_region
      %95 = dma.done [#allocation9], 4096
    $region53: #{tpu_custom_call.1} parent=1 // pred_fallthru
      _
    // Predicated region
    $region54: #{tpu_custom_call.1} parent=1 // pred_check
      _
    $region55: #{tpu_custom_call.1} parent=1 // pred_check_branch
      %97 = sbr.rel (0) target = $region57
    $region56: #{tpu_custom_call.1} parent=1 // pred_region
      %98 = dma.done [#allocation9], 4096
    $region57: #{tpu_custom_call.1} parent=1 // pred_fallthru
      _
    %v100 = vld [vmem:[#allocation2] sm:$0xff]
    %v101 = vpack.c.bf16 %v100, %v100
    %v102 = vld [vmem:[#allocation5] sm:$0xff]
    %v103 = vld [vmem:[#allocation5 + $0x8] sm:$0xff]
    %v104 = vld [vmem:[#allocation5 + $0x10] sm:$0xff]
    %v105 = vld [vmem:[#allocation5 + $0x18] sm:$0xff]
    %v106 = vld [vmem:[%s2] sm:$0x3]
    %v108 = vlaneseq
    %v109 = vshrl.u32 %v108, 7
    %v110 = vsub.s32 0, %v109
    %v111 = vrot.slane %v106, %v110
    %v112 = vlaneseq
    %v113 = vshrl.u32 %v112, 7
    %v114 = vsub.s32 1, %v113
    %v115 = vrot.slane %v106, %v114
    %v122 = vunpack.c.l.b16 %v102
    %v123 = vunpack.c.h.b16 %v102
    %v124 = vunpack.c.l.b16 %v103
    %v125 = vunpack.c.h.b16 %v103
    %v126 = vunpack.c.l.b16 %v104
    %v127 = vunpack.c.h.b16 %v104
    %v128 = vunpack.c.l.b16 %v105
    %v129 = vunpack.c.h.b16 %v105
    %v130 = vpack.c.b16 %v124, %v122
    %v131 = vpack.c.b16 %v125, %v123
    %v132 = vpack.c.b16 %v128, %v126
    %v133 = vpack.c.b16 %v129, %v127
    %vm138 = vcmask 261120
    %v140 = vsel %vm138, %v101, 0
    %142 = vmatprep.subr.bf16.mxu0 %v131
    %143 = vmatpush1.bf16.msra.mxu0 %v130
    %144 = vmatprep.subr.bf16.mxu0 %v133
    %145 = vmatpush1.bf16.msra.mxu0 %v132
    %146 = vmatprep.subr.bf16.mxu0 0
    %147 = vmatpush1.bf16.msra.mxu0 0
    %148 = vmatprep.subr.bf16.mxu0 0
    %149 = vmatpush1.bf16.msra.mxu0 0
    %150 = vmatprep.subr.bf16.mxu0 0
    %151 = vmatpush1.bf16.msra.mxu0 0
    %152 = vmatprep.subr.bf16.mxu0 0
    %153 = vmatpush1.bf16.msra.mxu0 0
    %154 = vmatprep.subr.bf16.mxu0 0
    %155 = vmatpush1.bf16.msra.mxu0 0
    %156 = vmatprep.subr.bf16.mxu0 0
    %157 = vmatpush1.bf16.msra.mxu0 0
    %158 = vmatprep.subr.bf16.mxu0 0
    %159 = vmatpush1.bf16.msra.mxu0 0
    %160 = vmatprep.subr.bf16.mxu0 0
    %161 = vmatpush1.bf16.msra.mxu0 0
    %162 = vmatprep.subr.bf16.mxu0 0
    %163 = vmatpush1.bf16.msra.mxu0 0
    %164 = vmatprep.subr.bf16.mxu0 0
    %165 = vmatpush1.bf16.msra.mxu0 0
    %166 = vmatprep.subr.bf16.mxu0 0
    %167 = vmatpush1.bf16.msra.mxu0 0
    %168 = vmatprep.subr.bf16.mxu0 0
    %169 = vmatpush1.bf16.msra.mxu0 0
    %170 = vmatprep.subr.bf16.mxu0 0
    %171 = vmatpush1.bf16.msra.mxu0 0
    %172 = vmatprep.subr.bf16.mxu0 0
    %173 = vmatpush1.bf16.msra.mxu0 0
    %174 = vmatprep.mubr.bf16.mxu0 0
    %175 = vmatmul.mubr.bf16.gmra.mrb[0].mxu0 %v140
    %v176 = vpop.f32.mrb[0].mxu0
    %v177 = vadd.f32 %v111, %v176
    %v178 = vpop.f32.mrb[0].mxu0
    %v179 = vadd.f32 %v115, %v178
    %v180 = vpop.f32.mrb[0].mxu0
    %v181 = vpop.f32.mrb[0].mxu0
    %182 = vdwg.mxu0
    %v183 = vmax.f32 %v177, 0.0
    %v184 = vmax.f32 %v179, 0.0
    %v185 = vpack.c.bf16 %v183, %v183
    %v186 = vpack.c.bf16 %v184, %v184
    %v187 = vld [vmem:[#allocation7] sm:$0xff]
    %v188 = vld [vmem:[#allocation7 + $0x8] sm:$0xff]
    %v189 = vld [vmem:[#allocation7 + $0x10] sm:$0xff]
    %v190 = vld [vmem:[#allocation7 + $0x18] sm:$0xff]
    %v191 = vld [vmem:[#allocation7 + $0x20] sm:$0xff]
    %v192 = vld [vmem:[#allocation7 + $0x28] sm:$0xff]
    %v193 = vld [vmem:[#allocation7 + $0x30] sm:$0xff]
    %v194 = vld [vmem:[#allocation7 + $0x38] sm:$0xff]
    %v195 = vld [vmem:[#allocation7 + $0x40] sm:$0xff]
    %v196 = vld [vmem:[#allocation7 + $0x48] sm:$0xff]
    %v197 = vld [vmem:[#allocation7 + $0x50] sm:$0xff]
    %v198 = vld [vmem:[#allocation7 + $0x58] sm:$0xff]
    %v199 = vld [vmem:[#allocation7 + $0x60] sm:$0xff]
    %v200 = vld [vmem:[#allocation7 + $0x68] sm:$0xff]
    %v201 = vld [vmem:[#allocation7 + $0x70] sm:$0xff]
    %v202 = vld [vmem:[#allocation7 + $0x78] sm:$0xff]
    %v203 = vld [vmem:[#allocation7 + $0x80] sm:$0xff]
    %v204 = vld [vmem:[#allocation7 + $0x88] sm:$0xff]
    %v205 = vld [vmem:[#allocation7 + $0x90] sm:$0xff]
    %v206 = vld [vmem:[#allocation7 + $0x98] sm:$0xff]
    %v207 = vld [vmem:[#allocation7 + $0xa0] sm:$0xff]
    %v208 = vld [vmem:[#allocation7 + $0xa8] sm:$0xff]
    %v209 = vld [vmem:[#allocation7 + $0xb0] sm:$0xff]
    %v210 = vld [vmem:[#allocation7 + $0xb8] sm:$0xff]
    %v211 = vld [vmem:[#allocation7 + $0xc0] sm:$0xff]
    %v212 = vld [vmem:[#allocation7 + $0xc8] sm:$0xff]
    %v213 = vld [vmem:[#allocation7 + $0xd0] sm:$0xff]
    %v214 = vld [vmem:[#allocation7 + $0xd8] sm:$0xff]
    %v215 = vld [vmem:[#allocation7 + $0xe0] sm:$0xff]
    %v216 = vld [vmem:[#allocation7 + $0xe8] sm:$0xff]
    %v217 = vld [vmem:[#allocation7 + $0xf0] sm:$0xff]
    %v218 = vld [vmem:[#allocation7 + $0xf8] sm:$0xff]
    %v219 = vld [vmem:[%s4] sm:$0x3]
    %v221 = vlaneseq
    %v222 = vshrl.u32 %v221, 7
    %v223 = vsub.s32 0, %v222
    %v224 = vrot.slane %v219, %v223
    %v225 = vlaneseq
    %v226 = vshrl.u32 %v225, 7
    %v227 = vsub.s32 1, %v226
    %v228 = vrot.slane %v219, %v227
    %v263 = vunpack.c.l.b16 %v187
    %v264 = vunpack.c.h.b16 %v187
    %v265 = vunpack.c.l.b16 %v188
    %v266 = vunpack.c.h.b16 %v188
    %v267 = vunpack.c.l.b16 %v189
    %v268 = vunpack.c.h.b16 %v189
    %v269 = vunpack.c.l.b16 %v190
    %v270 = vunpack.c.h.b16 %v190
    %v271 = vunpack.c.l.b16 %v191
    %v272 = vunpack.c.h.b16 %v191
    %v273 = vunpack.c.l.b16 %v192
    %v274 = vunpack.c.h.b16 %v192
    %v275 = vunpack.c.l.b16 %v193
    %v276 = vunpack.c.h.b16 %v193
    %v277 = vunpack.c.l.b16 %v194
    %v278 = vunpack.c.h.b16 %v194
    %v279 = vunpack.c.l.b16 %v195
    %v280 = vunpack.c.h.b16 %v195
    %v281 = vunpack.c.l.b16 %v196
    %v282 = vunpack.c.h.b16 %v196
    %v283 = vunpack.c.l.b16 %v197
    %v284 = vunpack.c.h.b16 %v197
    %v285 = vunpack.c.l.b16 %v198
    %v286 = vunpack.c.h.b16 %v198
    %v287 = vunpack.c.l.b16 %v199
    %v288 = vunpack.c.h.b16 %v199
    %v289 = vunpack.c.l.b16 %v200
    %v290 = vunpack.c.h.b16 %v200
    %v291 = vunpack.c.l.b16 %v201
    %v292 = vunpack.c.h.b16 %v201
    %v293 = vunpack.c.l.b16 %v202
    %v294 = vunpack.c.h.b16 %v202
    %v295 = vunpack.c.l.b16 %v203
    %v296 = vunpack.c.h.b16 %v203
    %v297 = vunpack.c.l.b16 %v204
    %v298 = vunpack.c.h.b16 %v204
    %v299 = vunpack.c.l.b16 %v205
    %v300 = vunpack.c.h.b16 %v205
    %v301 = vunpack.c.l.b16 %v206
    %v302 = vunpack.c.h.b16 %v206
    %v303 = vunpack.c.l.b16 %v207
    %v304 = vunpack.c.h.b16 %v207
    %v305 = vunpack.c.l.b16 %v208
    %v306 = vunpack.c.h.b16 %v208
    %v307 = vunpack.c.l.b16 %v209
    %v308 = vunpack.c.h.b16 %v209
    %v309 = vunpack.c.l.b16 %v210
    %v310 = vunpack.c.h.b16 %v210
    %v311 = vunpack.c.l.b16 %v211
    %v312 = vunpack.c.h.b16 %v211
    %v313 = vunpack.c.l.b16 %v212
    %v314 = vunpack.c.h.b16 %v212
    %v315 = vunpack.c.l.b16 %v213
    %v316 = vunpack.c.h.b16 %v213
    %v317 = vunpack.c.l.b16 %v214
    %v318 = vunpack.c.h.b16 %v214
    %v319 = vunpack.c.l.b16 %v215
    %v320 = vunpack.c.h.b16 %v215
    %v321 = vunpack.c.l.b16 %v216
    %v322 = vunpack.c.h.b16 %v216
    %v323 = vunpack.c.l.b16 %v217
    %v324 = vunpack.c.h.b16 %v217
    %v325 = vunpack.c.l.b16 %v218
    %v326 = vunpack.c.h.b16 %v218
    %v327 = vpack.c.b16 %v265, %v263
    %v328 = vpack.c.b16 %v266, %v264
    %v329 = vpack.c.b16 %v269, %v267
    %v330 = vpack.c.b16 %v270, %v268
    %v331 = vpack.c.b16 %v273, %v271
    %v332 = vpack.c.b16 %v274, %v272
    %v333 = vpack.c.b16 %v277, %v275
    %v334 = vpack.c.b16 %v278, %v276
    %v335 = vpack.c.b16 %v281, %v279
    %v336 = vpack.c.b16 %v282, %v280
    %v337 = vpack.c.b16 %v285, %v283
    %v338 = vpack.c.b16 %v286, %v284
    %v339 = vpack.c.b16 %v289, %v287
    %v340 = vpack.c.b16 %v290, %v288
    %v341 = vpack.c.b16 %v293, %v291
    %v342 = vpack.c.b16 %v294, %v292
    %v343 = vpack.c.b16 %v297, %v295
    %v344 = vpack.c.b16 %v298, %v296
    %v345 = vpack.c.b16 %v301, %v299
    %v346 = vpack.c.b16 %v302, %v300
    %v347 = vpack.c.b16 %v305, %v303
    %v348 = vpack.c.b16 %v306, %v304
    %v349 = vpack.c.b16 %v309, %v307
    %v350 = vpack.c.b16 %v310, %v308
    %v351 = vpack.c.b16 %v313, %v311
    %v352 = vpack.c.b16 %v314, %v312
    %v353 = vpack.c.b16 %v317, %v315
    %v354 = vpack.c.b16 %v318, %v316
    %v355 = vpack.c.b16 %v321, %v319
    %v356 = vpack.c.b16 %v322, %v320
    %v357 = vpack.c.b16 %v325, %v323
    %v358 = vpack.c.b16 %v326, %v324
    %391 = vmatprep.subr.bf16.mxu0 %v328
    %392 = vmatpush1.bf16.msra.mxu0 %v327
    %393 = vmatprep.subr.bf16.mxu0 %v330
    %394 = vmatpush1.bf16.msra.mxu0 %v329
    %395 = vmatprep.subr.bf16.mxu0 %v332
    %396 = vmatpush1.bf16.msra.mxu0 %v331
    %397 = vmatprep.subr.bf16.mxu0 %v334
    %398 = vmatpush1.bf16.msra.mxu0 %v333
    %399 = vmatprep.subr.bf16.mxu0 %v336
    %400 = vmatpush1.bf16.msra.mxu0 %v335
    %401 = vmatprep.subr.bf16.mxu0 %v338
    %402 = vmatpush1.bf16.msra.mxu0 %v337
    %403 = vmatprep.subr.bf16.mxu0 %v340
    %404 = vmatpush1.bf16.msra.mxu0 %v339
    %405 = vmatprep.subr.bf16.mxu0 %v342
    %406 = vmatpush1.bf16.msra.mxu0 %v341
    %407 = vmatprep.subr.bf16.mxu0 %v344
    %408 = vmatpush1.bf16.msra.mxu0 %v343
    %409 = vmatprep.subr.bf16.mxu0 %v346
    %410 = vmatpush1.bf16.msra.mxu0 %v345
    %411 = vmatprep.subr.bf16.mxu0 %v348
    %412 = vmatpush1.bf16.msra.mxu0 %v347
    %413 = vmatprep.subr.bf16.mxu0 %v350
    %414 = vmatpush1.bf16.msra.mxu0 %v349
    %415 = vmatprep.subr.bf16.mxu0 %v352
    %416 = vmatpush1.bf16.msra.mxu0 %v351
    %417 = vmatprep.subr.bf16.mxu0 %v354
    %418 = vmatpush1.bf16.msra.mxu0 %v353
    %419 = vmatprep.subr.bf16.mxu0 %v356
    %420 = vmatpush1.bf16.msra.mxu0 %v355
    %421 = vmatprep.subr.bf16.mxu0 %v358
    %422 = vmatpush1.bf16.msra.mxu0 %v357
    %423 = vmatprep.mubr.bf16.mxu0 %v186
    %424 = vmatmul.mubr.bf16.gmra.mrb[0].mxu0 %v185
    %v425 = vpop.f32.mrb[0].mxu0
    %v426 = vadd.f32 %v224, %v425
    %v427 = vpop.f32.mrb[0].mxu0
    %v428 = vadd.f32 %v228, %v427
    %v429 = vpop.f32.mrb[0].mxu0
    %v430 = vpop.f32.mrb[0].mxu0
    %431 = vdwg.mxu0
    %v432 = vmax.f32 %v426, 0.0
    %v433 = vmax.f32 %v428, 0.0
    %v434 = vpack.c.bf16 %v432, %v432
    %v435 = vpack.c.bf16 %v433, %v433
    %v436 = vld [vmem:[#allocation8] sm:$0xff]
    %v437 = vld [vmem:[#allocation8 + $0x8] sm:$0xff]
    %v438 = vld [vmem:[#allocation8 + $0x10] sm:$0xff]
    %v439 = vld [vmem:[#allocation8 + $0x18] sm:$0xff]
    %v440 = vld [vmem:[#allocation8 + $0x20] sm:$0xff]
    %v441 = vld [vmem:[#allocation8 + $0x28] sm:$0xff]
    %v442 = vld [vmem:[#allocation8 + $0x30] sm:$0xff]
    %v443 = vld [vmem:[#allocation8 + $0x38] sm:$0xff]
    %v444 = vld [vmem:[#allocation8 + $0x40] sm:$0xff]
    %v445 = vld [vmem:[#allocation8 + $0x48] sm:$0xff]
    %v446 = vld [vmem:[#allocation8 + $0x50] sm:$0xff]
    %v447 = vld [vmem:[#allocation8 + $0x58] sm:$0xff]
    %v448 = vld [vmem:[#allocation8 + $0x60] sm:$0xff]
    %v449 = vld [vmem:[#allocation8 + $0x68] sm:$0xff]
    %v450 = vld [vmem:[#allocation8 + $0x70] sm:$0xff]
    %v451 = vld [vmem:[#allocation8 + $0x78] sm:$0xff]
    %v452 = vld [vmem:[#allocation8 + $0x80] sm:$0xff]
    %v453 = vld [vmem:[#allocation8 + $0x88] sm:$0xff]
    %v454 = vld [vmem:[#allocation8 + $0x90] sm:$0xff]
    %v455 = vld [vmem:[#allocation8 + $0x98] sm:$0xff]
    %v456 = vld [vmem:[#allocation8 + $0xa0] sm:$0xff]
    %v457 = vld [vmem:[#allocation8 + $0xa8] sm:$0xff]
    %v458 = vld [vmem:[#allocation8 + $0xb0] sm:$0xff]
    %v459 = vld [vmem:[#allocation8 + $0xb8] sm:$0xff]
    %v460 = vld [vmem:[#allocation8 + $0xc0] sm:$0xff]
    %v461 = vld [vmem:[#allocation8 + $0xc8] sm:$0xff]
    %v462 = vld [vmem:[#allocation8 + $0xd0] sm:$0xff]
    %v463 = vld [vmem:[#allocation8 + $0xd8] sm:$0xff]
    %v464 = vld [vmem:[#allocation8 + $0xe0] sm:$0xff]
    %v465 = vld [vmem:[#allocation8 + $0xe8] sm:$0xff]
    %v466 = vld [vmem:[#allocation8 + $0xf0] sm:$0xff]
    %v467 = vld [vmem:[#allocation8 + $0xf8] sm:$0xff]
    %v468 = vld [vmem:[%s6] sm:$0x3]
    %v470 = vlaneseq
    %v471 = vshrl.u32 %v470, 7
    %v472 = vsub.s32 0, %v471
    %v473 = vrot.slane %v468, %v472
    %v474 = vlaneseq
    %v475 = vshrl.u32 %v474, 7
    %v476 = vsub.s32 1, %v475
    %v477 = vrot.slane %v468, %v476
    %v512 = vunpack.c.l.b16 %v436
    %v513 = vunpack.c.h.b16 %v436
    %v514 = vunpack.c.l.b16 %v437
    %v515 = vunpack.c.h.b16 %v437
    %v516 = vunpack.c.l.b16 %v438
    %v517 = vunpack.c.h.b16 %v438
    %v518 = vunpack.c.l.b16 %v439
    %v519 = vunpack.c.h.b16 %v439
    %v520 = vunpack.c.l.b16 %v440
    %v521 = vunpack.c.h.b16 %v440
    %v522 = vunpack.c.l.b16 %v441
    %v523 = vunpack.c.h.b16 %v441
    %v524 = vunpack.c.l.b16 %v442
    %v525 = vunpack.c.h.b16 %v442
    %v526 = vunpack.c.l.b16 %v443
    %v527 = vunpack.c.h.b16 %v443
    %v528 = vunpack.c.l.b16 %v444
    %v529 = vunpack.c.h.b16 %v444
    %v530 = vunpack.c.l.b16 %v445
    %v531 = vunpack.c.h.b16 %v445
    %v532 = vunpack.c.l.b16 %v446
    %v533 = vunpack.c.h.b16 %v446
    %v534 = vunpack.c.l.b16 %v447
    %v535 = vunpack.c.h.b16 %v447
    %v536 = vunpack.c.l.b16 %v448
    %v537 = vunpack.c.h.b16 %v448
    %v538 = vunpack.c.l.b16 %v449
    %v539 = vunpack.c.h.b16 %v449
    %v540 = vunpack.c.l.b16 %v450
    %v541 = vunpack.c.h.b16 %v450
    %v542 = vunpack.c.l.b16 %v451
    %v543 = vunpack.c.h.b16 %v451
    %v544 = vunpack.c.l.b16 %v452
    %v545 = vunpack.c.h.b16 %v452
    %v546 = vunpack.c.l.b16 %v453
    %v547 = vunpack.c.h.b16 %v453
    %v548 = vunpack.c.l.b16 %v454
    %v549 = vunpack.c.h.b16 %v454
    %v550 = vunpack.c.l.b16 %v455
    %v551 = vunpack.c.h.b16 %v455
    %v552 = vunpack.c.l.b16 %v456
    %v553 = vunpack.c.h.b16 %v456
    %v554 = vunpack.c.l.b16 %v457
    %v555 = vunpack.c.h.b16 %v457
    %v556 = vunpack.c.l.b16 %v458
    %v557 = vunpack.c.h.b16 %v458
    %v558 = vunpack.c.l.b16 %v459
    %v559 = vunpack.c.h.b16 %v459
    %v560 = vunpack.c.l.b16 %v460
    %v561 = vunpack.c.h.b16 %v460
    %v562 = vunpack.c.l.b16 %v461
    %v563 = vunpack.c.h.b16 %v461
    %v564 = vunpack.c.l.b16 %v462
    %v565 = vunpack.c.h.b16 %v462
    %v566 = vunpack.c.l.b16 %v463
    %v567 = vunpack.c.h.b16 %v463
    %v568 = vunpack.c.l.b16 %v464
    %v569 = vunpack.c.h.b16 %v464
    %v570 = vunpack.c.l.b16 %v465
    %v571 = vunpack.c.h.b16 %v465
    %v572 = vunpack.c.l.b16 %v466
    %v573 = vunpack.c.h.b16 %v466
    %v574 = vunpack.c.l.b16 %v467
    %v575 = vunpack.c.h.b16 %v467
    %v576 = vpack.c.b16 %v514, %v512
    %v577 = vpack.c.b16 %v515, %v513
    %v578 = vpack.c.b16 %v518, %v516
    %v579 = vpack.c.b16 %v519, %v517
    %v580 = vpack.c.b16 %v522, %v520
    %v581 = vpack.c.b16 %v523, %v521
    %v582 = vpack.c.b16 %v526, %v524
    %v583 = vpack.c.b16 %v527, %v525
    %v584 = vpack.c.b16 %v530, %v528
    %v585 = vpack.c.b16 %v531, %v529
    %v586 = vpack.c.b16 %v534, %v532
    %v587 = vpack.c.b16 %v535, %v533
    %v588 = vpack.c.b16 %v538, %v536
    %v589 = vpack.c.b16 %v539, %v537
    %v590 = vpack.c.b16 %v542, %v540
    %v591 = vpack.c.b16 %v543, %v541
    %v592 = vpack.c.b16 %v546, %v544
    %v593 = vpack.c.b16 %v547, %v545
    %v594 = vpack.c.b16 %v550, %v548
    %v595 = vpack.c.b16 %v551, %v549
    %v596 = vpack.c.b16 %v554, %v552
    %v597 = vpack.c.b16 %v555, %v553
    %v598 = vpack.c.b16 %v558, %v556
    %v599 = vpack.c.b16 %v559, %v557
    %v600 = vpack.c.b16 %v562, %v560
    %v601 = vpack.c.b16 %v563, %v561
    %v602 = vpack.c.b16 %v566, %v564
    %v603 = vpack.c.b16 %v567, %v565
    %v604 = vpack.c.b16 %v570, %v568
    %v605 = vpack.c.b16 %v571, %v569
    %v606 = vpack.c.b16 %v574, %v572
    %v607 = vpack.c.b16 %v575, %v573
    %640 = vmatprep.subr.bf16.mxu0 %v577
    %641 = vmatpush1.bf16.msra.mxu0 %v576
    %642 = vmatprep.subr.bf16.mxu0 %v579
    %643 = vmatpush1.bf16.msra.mxu0 %v578
    %644 = vmatprep.subr.bf16.mxu0 %v581
    %645 = vmatpush1.bf16.msra.mxu0 %v580
    %646 = vmatprep.subr.bf16.mxu0 %v583
    %647 = vmatpush1.bf16.msra.mxu0 %v582
    %648 = vmatprep.subr.bf16.mxu0 %v585
    %649 = vmatpush1.bf16.msra.mxu0 %v584
    %650 = vmatprep.subr.bf16.mxu0 %v587
    %651 = vmatpush1.bf16.msra.mxu0 %v586
    %652 = vmatprep.subr.bf16.mxu0 %v589
    %653 = vmatpush1.bf16.msra.mxu0 %v588
    %654 = vmatprep.subr.bf16.mxu0 %v591
    %655 = vmatpush1.bf16.msra.mxu0 %v590
    %656 = vmatprep.subr.bf16.mxu0 %v593
    %657 = vmatpush1.bf16.msra.mxu0 %v592
    %658 = vmatprep.subr.bf16.mxu0 %v595
    %659 = vmatpush1.bf16.msra.mxu0 %v594
    %660 = vmatprep.subr.bf16.mxu0 %v597
    %661 = vmatpush1.bf16.msra.mxu0 %v596
    %662 = vmatprep.subr.bf16.mxu0 %v599
    %663 = vmatpush1.bf16.msra.mxu0 %v598
    %664 = vmatprep.subr.bf16.mxu0 %v601
    %665 = vmatpush1.bf16.msra.mxu0 %v600
    %666 = vmatprep.subr.bf16.mxu0 %v603
    %667 = vmatpush1.bf16.msra.mxu0 %v602
    %668 = vmatprep.subr.bf16.mxu0 %v605
    %669 = vmatpush1.bf16.msra.mxu0 %v604
    %670 = vmatprep.subr.bf16.mxu0 %v607
    %671 = vmatpush1.bf16.msra.mxu0 %v606
    %672 = vmatprep.mubr.bf16.mxu0 %v435
    %673 = vmatmul.mubr.bf16.gmra.mrb[0].mxu0 %v434
    %v674 = vpop.f32.mrb[0].mxu0
    %v675 = vadd.f32 %v473, %v674
    %v676 = vpop.f32.mrb[0].mxu0
    %v677 = vadd.f32 %v477, %v676
    %v678 = vpop.f32.mrb[0].mxu0
    %v679 = vpop.f32.mrb[0].mxu0
    %680 = vdwg.mxu0
    %v681 = vmax.f32 %v675, 0.0
    %v682 = vmax.f32 %v677, 0.0
    %v683 = vpack.c.bf16 %v681, %v681
    %v684 = vpack.c.bf16 %v682, %v682
    %v685 = vld [vmem:[#allocation10] sm:$0xff]
    %v686 = vld [vmem:[#allocation10 + $0x8] sm:$0xff]
    %v687 = vld [vmem:[#allocation10 + $0x10] sm:$0xff]
    %v688 = vld [vmem:[#allocation10 + $0x18] sm:$0xff]
    %v689 = vld [vmem:[#allocation10 + $0x20] sm:$0xff]
    %v690 = vld [vmem:[#allocation10 + $0x28] sm:$0xff]
    %v691 = vld [vmem:[#allocation10 + $0x30] sm:$0xff]
    %v692 = vld [vmem:[#allocation10 + $0x38] sm:$0xff]
    %v693 = vld [vmem:[#allocation10 + $0x40] sm:$0xff]
    %v694 = vld [vmem:[#allocation10 + $0x48] sm:$0xff]
    %v695 = vld [vmem:[#allocation10 + $0x50] sm:$0xff]
    %v696 = vld [vmem:[#allocation10 + $0x58] sm:$0xff]
    %v697 = vld [vmem:[#allocation10 + $0x60] sm:$0xff]
    %v698 = vld [vmem:[#allocation10 + $0x68] sm:$0xff]
    %v699 = vld [vmem:[#allocation10 + $0x70] sm:$0xff]
    %v700 = vld [vmem:[#allocation10 + $0x78] sm:$0xff]
    %v701 = vld [vmem:[#allocation10 + $0x80] sm:$0xff]
    %v702 = vld [vmem:[#allocation10 + $0x88] sm:$0xff]
    %v703 = vld [vmem:[#allocation10 + $0x90] sm:$0xff]
    %v704 = vld [vmem:[#allocation10 + $0x98] sm:$0xff]
    %v705 = vld [vmem:[#allocation10 + $0xa0] sm:$0xff]
    %v706 = vld [vmem:[#allocation10 + $0xa8] sm:$0xff]
    %v707 = vld [vmem:[#allocation10 + $0xb0] sm:$0xff]
    %v708 = vld [vmem:[#allocation10 + $0xb8] sm:$0xff]
    %v709 = vld [vmem:[#allocation10 + $0xc0] sm:$0xff]
    %v710 = vld [vmem:[#allocation10 + $0xc8] sm:$0xff]
    %v711 = vld [vmem:[#allocation10 + $0xd0] sm:$0xff]
    %v712 = vld [vmem:[#allocation10 + $0xd8] sm:$0xff]
    %v713 = vld [vmem:[#allocation10 + $0xe0] sm:$0xff]
    %v714 = vld [vmem:[#allocation10 + $0xe8] sm:$0xff]
    %v715 = vld [vmem:[#allocation10 + $0xf0] sm:$0xff]
    %v716 = vld [vmem:[#allocation10 + $0xf8] sm:$0xff]
    %v717 = vld [vmem:[%s8] sm:$0x3]
    %v719 = vlaneseq
    %v720 = vshrl.u32 %v719, 7
    %v721 = vsub.s32 0, %v720
    %v722 = vrot.slane %v717, %v721
    %v723 = vlaneseq
    %v724 = vshrl.u32 %v723, 7
    %v725 = vsub.s32 1, %v724
    %v726 = vrot.slane %v717, %v725
    %v761 = vunpack.c.l.b16 %v685
    %v762 = vunpack.c.h.b16 %v685
    %v763 = vunpack.c.l.b16 %v686
    %v764 = vunpack.c.h.b16 %v686
    %v765 = vunpack.c.l.b16 %v687
    %v766 = vunpack.c.h.b16 %v687
    %v767 = vunpack.c.l.b16 %v688
    %v768 = vunpack.c.h.b16 %v688
    %v769 = vunpack.c.l.b16 %v689
    %v770 = vunpack.c.h.b16 %v689
    %v771 = vunpack.c.l.b16 %v690
    %v772 = vunpack.c.h.b16 %v690
    %v773 = vunpack.c.l.b16 %v691
    %v774 = vunpack.c.h.b16 %v691
    %v775 = vunpack.c.l.b16 %v692
    %v776 = vunpack.c.h.b16 %v692
    %v777 = vunpack.c.l.b16 %v693
    %v778 = vunpack.c.h.b16 %v693
    %v779 = vunpack.c.l.b16 %v694
    %v780 = vunpack.c.h.b16 %v694
    %v781 = vunpack.c.l.b16 %v695
    %v782 = vunpack.c.h.b16 %v695
    %v783 = vunpack.c.l.b16 %v696
    %v784 = vunpack.c.h.b16 %v696
    %v785 = vunpack.c.l.b16 %v697
    %v786 = vunpack.c.h.b16 %v697
    %v787 = vunpack.c.l.b16 %v698
    %v788 = vunpack.c.h.b16 %v698
    %v789 = vunpack.c.l.b16 %v699
    %v790 = vunpack.c.h.b16 %v699
    %v791 = vunpack.c.l.b16 %v700
    %v792 = vunpack.c.h.b16 %v700
    %v793 = vunpack.c.l.b16 %v701
    %v794 = vunpack.c.h.b16 %v701
    %v795 = vunpack.c.l.b16 %v702
    %v796 = vunpack.c.h.b16 %v702
    %v797 = vunpack.c.l.b16 %v703
    %v798 = vunpack.c.h.b16 %v703
    %v799 = vunpack.c.l.b16 %v704
    %v800 = vunpack.c.h.b16 %v704
    %v801 = vunpack.c.l.b16 %v705
    %v802 = vunpack.c.h.b16 %v705
    %v803 = vunpack.c.l.b16 %v706
    %v804 = vunpack.c.h.b16 %v706
    %v805 = vunpack.c.l.b16 %v707
    %v806 = vunpack.c.h.b16 %v707
    %v807 = vunpack.c.l.b16 %v708
    %v808 = vunpack.c.h.b16 %v708
    %v809 = vunpack.c.l.b16 %v709
    %v810 = vunpack.c.h.b16 %v709
    %v811 = vunpack.c.l.b16 %v710
    %v812 = vunpack.c.h.b16 %v710
    %v813 = vunpack.c.l.b16 %v711
    %v814 = vunpack.c.h.b16 %v711
    %v815 = vunpack.c.l.b16 %v712
    %v816 = vunpack.c.h.b16 %v712
    %v817 = vunpack.c.l.b16 %v713
    %v818 = vunpack.c.h.b16 %v713
    %v819 = vunpack.c.l.b16 %v714
    %v820 = vunpack.c.h.b16 %v714
    %v821 = vunpack.c.l.b16 %v715
    %v822 = vunpack.c.h.b16 %v715
    %v823 = vunpack.c.l.b16 %v716
    %v824 = vunpack.c.h.b16 %v716
    %v825 = vpack.c.b16 %v763, %v761
    %v826 = vpack.c.b16 %v764, %v762
    %v827 = vpack.c.b16 %v767, %v765
    %v828 = vpack.c.b16 %v768, %v766
    %v829 = vpack.c.b16 %v771, %v769
    %v830 = vpack.c.b16 %v772, %v770
    %v831 = vpack.c.b16 %v775, %v773
    %v832 = vpack.c.b16 %v776, %v774
    %v833 = vpack.c.b16 %v779, %v777
    %v834 = vpack.c.b16 %v780, %v778
    %v835 = vpack.c.b16 %v783, %v781
    %v836 = vpack.c.b16 %v784, %v782
    %v837 = vpack.c.b16 %v787, %v785
    %v838 = vpack.c.b16 %v788, %v786
    %v839 = vpack.c.b16 %v791, %v789
    %v840 = vpack.c.b16 %v792, %v790
    %v841 = vpack.c.b16 %v795, %v793
    %v842 = vpack.c.b16 %v796, %v794
    %v843 = vpack.c.b16 %v799, %v797
    %v844 = vpack.c.b16 %v800, %v798
    %v845 = vpack.c.b16 %v803, %v801
    %v846 = vpack.c.b16 %v804, %v802
    %v847 = vpack.c.b16 %v807, %v805
    %v848 = vpack.c.b16 %v808, %v806
    %v849 = vpack.c.b16 %v811, %v809
    %v850 = vpack.c.b16 %v812, %v810
    %v851 = vpack.c.b16 %v815, %v813
    %v852 = vpack.c.b16 %v816, %v814
    %v853 = vpack.c.b16 %v819, %v817
    %v854 = vpack.c.b16 %v820, %v818
    %v855 = vpack.c.b16 %v823, %v821
    %v856 = vpack.c.b16 %v824, %v822
    %889 = vmatprep.subr.bf16.mxu0 %v826
    %890 = vmatpush1.bf16.msra.mxu0 %v825
    %891 = vmatprep.subr.bf16.mxu0 %v828
    %892 = vmatpush1.bf16.msra.mxu0 %v827
    %893 = vmatprep.subr.bf16.mxu0 %v830
    %894 = vmatpush1.bf16.msra.mxu0 %v829
    %895 = vmatprep.subr.bf16.mxu0 %v832
    %896 = vmatpush1.bf16.msra.mxu0 %v831
    %897 = vmatprep.subr.bf16.mxu0 %v834
    %898 = vmatpush1.bf16.msra.mxu0 %v833
    %899 = vmatprep.subr.bf16.mxu0 %v836
    %900 = vmatpush1.bf16.msra.mxu0 %v835
    %901 = vmatprep.subr.bf16.mxu0 %v838
    %902 = vmatpush1.bf16.msra.mxu0 %v837
    %903 = vmatprep.subr.bf16.mxu0 %v840
    %904 = vmatpush1.bf16.msra.mxu0 %v839
    %905 = vmatprep.subr.bf16.mxu0 %v842
    %906 = vmatpush1.bf16.msra.mxu0 %v841
    %907 = vmatprep.subr.bf16.mxu0 %v844
    %908 = vmatpush1.bf16.msra.mxu0 %v843
    %909 = vmatprep.subr.bf16.mxu0 %v846
    %910 = vmatpush1.bf16.msra.mxu0 %v845
    %911 = vmatprep.subr.bf16.mxu0 %v848
    %912 = vmatpush1.bf16.msra.mxu0 %v847
    %913 = vmatprep.subr.bf16.mxu0 %v850
    %914 = vmatpush1.bf16.msra.mxu0 %v849
    %915 = vmatprep.subr.bf16.mxu0 %v852
    %916 = vmatpush1.bf16.msra.mxu0 %v851
    %917 = vmatprep.subr.bf16.mxu0 %v854
    %918 = vmatpush1.bf16.msra.mxu0 %v853
    %919 = vmatprep.subr.bf16.mxu0 %v856
    %920 = vmatpush1.bf16.msra.mxu0 %v855
    %921 = vmatprep.mubr.bf16.mxu0 %v684
    %922 = vmatmul.mubr.bf16.gmra.mrb[0].mxu0 %v683
    %v923 = vpop.f32.mrb[0].mxu0
    %v924 = vadd.f32 %v722, %v923
    %v925 = vpop.f32.mrb[0].mxu0
    %v926 = vadd.f32 %v726, %v925
    %v927 = vpop.f32.mrb[0].mxu0
    %v928 = vpop.f32.mrb[0].mxu0
    %929 = vdwg.mxu0
    %930 = vst [vmem:[#allocation11] sm:$0xff] %v924
    %931 = vst [vmem:[#allocation11 + $0x8] sm:$0xff] %v926
    // Predicated region
    $region58: #{tpu_custom_call.1} parent=1 // pred_check
      _
    $region59: #{tpu_custom_call.1} parent=1 // pred_check_branch
      %933 = sbr.rel (0) target = $region61
    $region60: #{tpu_custom_call.1} parent=1 // pred_region
      %s935 = ssub.s32 256, 256
      %936 = vsyncadd [#allocation4], %s935
      %s938 = sshll.u32 [#allocation11], 4
      %s939 = int_to_ptr.vmem [resolvable:$true] %s938
      %941 = dma.vmem_to_hbm [thread:$0]  %s939, 256, %s9, [#allocation4]
    $region61: #{tpu_custom_call.1} parent=1 // pred_fallthru
      _
    // Predicated region
    $region62: #{tpu_custom_call.1} parent=1 // pred_check
      _
    $region63: #{tpu_custom_call.1} parent=1 // pred_check_branch
      %943 = sbr.rel (0) target = $region65
    $region64: #{tpu_custom_call.1} parent=1 // pred_region
      %944 = dma.done [#allocation4], 256
    $region65: #{tpu_custom_call.1} parent=1 // pred_fallthru
      _
    %945 = vsyncpa [#allocation3], 1
    %946 = vsyncpa [#allocation6], 1
    %947 = vsyncpa [#allocation9], 1
    %948 = vsyncpa [#allocation4], 1

</llo_original>
